<compile_context>
chip_gen: v6e
topology: v6e:2x2x1
jax: 0.10.0
libtpu: 0.0.40
codegen_flags: <defaults>
</compile_context>

<pallas_src>
import jax
import jax.numpy as jnp
from jax.experimental import pallas as pl
from jax.experimental.pallas import tpu as pltpu

# ---- small but structurally faithful hyperparameters -------------------------------
WINDOW_LEN   = 16                 # input_shape[0]
N_FEATS      = 4                  # input_shape[1]
N_ASSETS     = 4                  # output_shape[0]
ACTION_ATOMS = 3                  # output_shape[1]
ACCOUNT_LEN  = N_ASSETS + 1       # portfolio / account-info vector length
D_MODEL      = 32
CHANNELS     = (16, 16)
KERNELS      = (5, 5)             # strides=(1,1), no padding, act_fn=SiLU

C1, C2 = CHANNELS
K1, K2 = KERNELS
L1 = WINDOW_LEN - K1 + 1          # 12 : length after conv1
L2 = L1 - K2 + 1                  # 8  : length after conv2
QDIM = N_ASSETS * ACTION_ATOMS    # 12
QPAD = 128                        # lane-dense padded output width (2*QDIM=24 lives in it)


def _silu_approx(v):
    """SiLU in f32; the reciprocal rides the EUP slot (exp is already there)."""
    return v * pl.reciprocal(1.0 + jnp.exp(-v), approx=True)


def _twin_q_kernel(price_ref, port_ref,
                   w1_ref, b1_ref, w2_ref, b2_ref,
                   pw_ref, pb_ref, aw_ref, ab_ref,
                   ow_ref, ob_ref,
                   q_ref):
    """Fused TwinQ forward for one batch tile: 5 MXU matmuls total for both heads.

    im2col slabs are built with static slices + sublane/lane concatenation only
    (no vector reshapes). Matmul inputs are bf16, accumulation/SiLU are f32."""
    BT = price_ref.shape[0]
    mmt = jnp.bfloat16

    # hoisted loads: every operand is read exactly once
    price = price_ref[...]                      # (BT, W, F)       f32
    port = port_ref[...]                        # (BT, P)          f32
    w1 = w1_ref[...]                            # (K1*F, 2*C1)     bf16
    w2 = w2_ref[...]                            # (K2*2*C1, 2*C2)  bf16
    pw = pw_ref[...]                            # (L2*2*C2, 2*D)   bf16
    aw = aw_ref[...]                            # (P, 2*D)         bf16
    ow = ow_ref[...]                            # (2*D, QPAD)      bf16

    # ---- conv1 (kernel=K1, stride=1, valid) as one batched im2col matmul ------------
    x1c = jnp.concatenate([price[:, k:k + L1, :] for k in range(K1)], axis=-1)  # (BT,L1,K1*F)
    x1 = jnp.concatenate([x1c[b] for b in range(BT)], axis=0)                   # (BT*L1,K1*F)
    h = jnp.dot(x1.astype(mmt), w1, preferred_element_type=jnp.float32)
    h = _silu_approx(h + b1_ref[...])                                           # (BT*L1,2*C1)

    # ---- conv2 -----------------------------------------------------------------------
    x2 = jnp.concatenate(
        [jnp.concatenate([h[b * L1 + k: b * L1 + k + L2, :] for k in range(K2)], axis=-1)
         for b in range(BT)], axis=0)                                           # (BT*L2,K2*2*C1)
    g = jnp.dot(x2.astype(mmt), w2, preferred_element_type=jnp.float32)
    g = _silu_approx(g + b2_ref[...])                                           # (BT*L2,2*C2)

    # ---- price projection over flattened conv features (time-major, channel-minor) ---
    gf = jnp.concatenate(
        [jnp.concatenate([g[b * L2 + t: b * L2 + t + 1, :] for t in range(L2)], axis=-1)
         for b in range(BT)], axis=0)                                           # (BT, L2*2*C2)
    pe = jnp.dot(gf.astype(mmt), pw, preferred_element_type=jnp.float32) + pb_ref[...]

    # ---- portfolio projection ---------------------------------------------------------
    ae = jnp.dot(port.astype(mmt), aw, preferred_element_type=jnp.float32) + ab_ref[...]

    # ---- gated state embedding + output head (lane-dense, single batched store) ------
    emb = _silu_approx(pe * ae)                                                 # (BT, 2*D) f32
    q = jnp.dot(emb.astype(mmt), ow, preferred_element_type=jnp.float32) + ob_ref[...]
    q_ref[...] = q                                                              # (BT, QPAD)


def twin_q_forward(price, port, fp):
    """Fused forward of both Q heads. Returns (q1, q2), each (B, N_ASSETS, ACTION_ATOMS)."""
    B = price.shape[0]
    BT = B if B <= 8 else 8          # batch tile; tiled over a "parallel" grid axis
    assert B % BT == 0, "batch must be divisible by the batch tile"
    grid = (B // BT,)

    weights = (fp["w1"], fp["b1"], fp["w2"], fp["b2"],
               fp["pw"], fp["pb"], fp["aw"], fp["ab"],
               fp["ow"], fp["ob"])

    def full_spec(a):
        nd = a.ndim
        return pl.BlockSpec(a.shape, lambda i, _n=nd: (0,) * _n)

    q = pl.pallas_call(
        _twin_q_kernel,
        out_shape=jax.ShapeDtypeStruct((B, QPAD), jnp.float32),
        grid=grid,
        in_specs=[pl.BlockSpec((BT, WINDOW_LEN, N_FEATS), lambda i: (i, 0, 0)),
                  pl.BlockSpec((BT, ACCOUNT_LEN), lambda i: (i, 0))]
                 + [full_spec(w) for w in weights],
        out_specs=pl.BlockSpec((BT, QPAD), lambda i: (i, 0)),
        compiler_params=pltpu.CompilerParams(dimension_semantics=("parallel",)),
    )(price, port, *weights)

    q1 = q[:, :QDIM].reshape(B, N_ASSETS, ACTION_ATOMS)
    q2 = q[:, QDIM:2 * QDIM].reshape(B, N_ASSETS, ACTION_ATOMS)
    return q1, q2


def init_conv_critic_params(key):
    ks = jax.random.split(key, 6)

    def w(k, shape, fan_in):
        return jax.random.normal(k, shape, jnp.float32) / jnp.sqrt(float(fan_in))

    bks = jax.random.split(ks[5], 5)
    return dict(
        c1w=w(ks[0], (K1, N_FEATS, C1), K1 * N_FEATS),
        c1b=0.01 * jax.random.normal(bks[0], (1, C1), jnp.float32),
        c2w=w(ks[1], (K2, C1, C2), K2 * C1),
        c2b=0.01 * jax.random.normal(bks[1], (1, C2), jnp.float32),
        pw=w(ks[2], (L2, C2, D_MODEL), L2 * C2),
        pb=0.01 * jax.random.normal(bks[2], (1, D_MODEL), jnp.float32),
        aw=w(ks[3], (ACCOUNT_LEN, D_MODEL), ACCOUNT_LEN),
        ab=0.01 * jax.random.normal(bks[3], (1, D_MODEL), jnp.float32),
        ow=w(ks[4], (D_MODEL, QDIM), D_MODEL),
        ob=0.01 * jax.random.normal(bks[4], (1, QDIM), jnp.float32),
    )


def fuse_twin_params(p1, p2):
    """Pack both heads so one matmul per layer serves both.

    conv1: concat along C_out.  conv2 / price-proj / output: block-diagonal so the two
    heads never mix.  Output head is zero-padded to QPAD lanes for an unmasked store.
    Matmul weights are stored bf16 (MXU inputs); biases stay f32 (added to f32 acc)."""
    D = D_MODEL
    bf = jnp.bfloat16

    w1 = jnp.concatenate([p1["c1w"], p2["c1w"]], axis=-1).reshape(K1 * N_FEATS, 2 * C1)
    b1 = jnp.concatenate([p1["c1b"], p2["c1b"]], axis=-1)

    w2 = jnp.zeros((K2, 2 * C1, 2 * C2), jnp.float32)
    w2 = w2.at[:, :C1, :C2].set(p1["c2w"]).at[:, C1:, C2:].set(p2["c2w"])
    w2 = w2.reshape(K2 * 2 * C1, 2 * C2)
    b2 = jnp.concatenate([p1["c2b"], p2["c2b"]], axis=-1)

    pw = jnp.zeros((L2, 2 * C2, 2 * D), jnp.float32)
    pw = pw.at[:, :C2, :D].set(p1["pw"]).at[:, C2:, D:].set(p2["pw"])
    pw = pw.reshape(L2 * 2 * C2, 2 * D)
    pb = jnp.concatenate([p1["pb"], p2["pb"]], axis=-1)

    aw = jnp.concatenate([p1["aw"], p2["aw"]], axis=-1)
    ab = jnp.concatenate([p1["ab"], p2["ab"]], axis=-1)

    ow = jnp.zeros((2 * D, QPAD), jnp.float32)
    ow = ow.at[:D, :QDIM].set(p1["ow"]).at[D:, QDIM:2 * QDIM].set(p2["ow"])
    ob = jnp.zeros((1, QPAD), jnp.float32)
    ob = ob.at[:, :QDIM].set(p1["ob"]).at[:, QDIM:2 * QDIM].set(p2["ob"])

    return dict(w1=w1.astype(bf), b1=b1, w2=w2.astype(bf), b2=b2,
                pw=pw.astype(bf), pb=pb, aw=aw.astype(bf), ab=ab,
                ow=ow.astype(bf), ob=ob)


class TwinQNetwork:
    """Two independent ConvCriticQ heads fused into a single Pallas kernel launch."""

    def __init__(self, key):
        k1, k2 = jax.random.split(key)
        self.q1_params = init_conv_critic_params(k1)
        self.q2_params = init_conv_critic_params(k2)
        self.fused = fuse_twin_params(self.q1_params, self.q2_params)

    def __call__(self, state):
        # state ~ madigan State(price, portfolio[, timestamp]); timestamp unused in forward
        price, port = state
        return twin_q_forward(price, port, self.fused)


# ---- pure-JAX f32 reference for numerical sanity check -------------------------------
def _reference_q(price, port, p):
    B = price.shape[0]
    h = jnp.zeros((B, L1, C1), jnp.float32)
    for k in range(K1):
        h += jnp.einsum("blf,fc->blc", price[:, k:k + L1, :], p["c1w"][k])
    h = jax.nn.silu(h + p["c1b"])
    g = jnp.zeros((B, L2, C2), jnp.float32)
    for k in range(K2):
        g += jnp.einsum("blc,cd->bld", h[:, k:k + L2, :], p["c2w"][k])
    g = jax.nn.silu(g + p["c2b"])
    pe = jnp.einsum("blc,lcd->bd", g, p["pw"]) + p["pb"]
    ae = port @ p["aw"] + p["ab"]
    emb = jax.nn.silu(pe * ae)
    q = emb @ p["ow"] + p["ob"]
    return q.reshape(B, N_ASSETS, ACTION_ATOMS)


if __name__ == "__main__":
    key = jax.random.PRNGKey(0)
    k_price, k_port, k_net = jax.random.split(key, 3)

    B = 2
    price = jax.random.normal(k_price, (B, WINDOW_LEN, N_FEATS), jnp.float32)
    port = jax.random.normal(k_port, (B, ACCOUNT_LEN), jnp.float32)

    net = TwinQNetwork(k_net)
    q1, q2 = net((price, port))
    jax.block_until_ready((q1, q2))

    assert q1.shape == (B, N_ASSETS, ACTION_ATOMS)
    assert q2.shape == (B, N_ASSETS, ACTION_ATOMS)
    r1 = _reference_q(price, port, net.q1_params)
    r2 = _reference_q(price, port, net.q2_params)
    # kernel uses bf16 MXU inputs + approx EUP reciprocal in SiLU vs f32 reference
    assert jnp.allclose(q1, r1, rtol=2e-2, atol=2e-2), float(jnp.max(jnp.abs(q1 - r1)))
    assert jnp.allclose(q2, r2, rtol=2e-2, atol=2e-2), float(jnp.max(jnp.abs(q2 - r2)))

    print("KERNEL_OK")
</pallas_src>

<mosaic_0001>
module attributes {stable_mosaic.version = 11 : i64} {
  func.func @_twin_q_kernel(%arg0: i32, %arg1: memref<2x16x4xf32, #tpu.memory_space<vmem>>, %arg2: memref<2x5xf32, #tpu.memory_space<vmem>>, %arg3: memref<20x32xbf16, #tpu.memory_space<vmem>>, %arg4: memref<1x32xf32, #tpu.memory_space<vmem>>, %arg5: memref<160x32xbf16, #tpu.memory_space<vmem>>, %arg6: memref<1x32xf32, #tpu.memory_space<vmem>>, %arg7: memref<256x64xbf16, #tpu.memory_space<vmem>>, %arg8: memref<1x64xf32, #tpu.memory_space<vmem>>, %arg9: memref<5x64xbf16, #tpu.memory_space<vmem>>, %arg10: memref<1x64xf32, #tpu.memory_space<vmem>>, %arg11: memref<64x128xbf16, #tpu.memory_space<vmem>>, %arg12: memref<1x128xf32, #tpu.memory_space<vmem>>, %arg13: memref<2x128xf32, #tpu.memory_space<vmem>>) attributes {dimension_semantics = [#tpu.dimension_semantics<parallel>], iteration_bounds = array<i64: 1>, scalar_prefetch = 0 : i64, scratch_operands = 0 : i64, tpu.core_type = #tpu.core_type<tc>, window_params = [{transform_indices = @transform_0, window_bounds = array<i64: 2, 16, 4>}, {transform_indices = @transform_1, window_bounds = array<i64: 2, 5>}, {pipeline_mode = #tpu.pipeline_mode<synchronous>, transform_indices = @transform_2, window_bounds = array<i64: 20, 32>}, {pipeline_mode = #tpu.pipeline_mode<synchronous>, transform_indices = @transform_3, window_bounds = array<i64: 1, 32>}, {pipeline_mode = #tpu.pipeline_mode<synchronous>, transform_indices = @transform_4, window_bounds = array<i64: 160, 32>}, {pipeline_mode = #tpu.pipeline_mode<synchronous>, transform_indices = @transform_5, window_bounds = array<i64: 1, 32>}, {pipeline_mode = #tpu.pipeline_mode<synchronous>, transform_indices = @transform_6, window_bounds = array<i64: 256, 64>}, {pipeline_mode = #tpu.pipeline_mode<synchronous>, transform_indices = @transform_7, window_bounds = array<i64: 1, 64>}, {pipeline_mode = #tpu.pipeline_mode<synchronous>, transform_indices = @transform_8, window_bounds = array<i64: 5, 64>}, {pipeline_mode = #tpu.pipeline_mode<synchronous>, transform_indices = @transform_9, window_bounds = array<i64: 1, 64>}, {pipeline_mode = #tpu.pipeline_mode<synchronous>, transform_indices = @transform_10, window_bounds = array<i64: 64, 128>}, {pipeline_mode = #tpu.pipeline_mode<synchronous>, transform_indices = @transform_11, window_bounds = array<i64: 1, 128>}, {transform_indices = @transform_12, window_bounds = array<i64: 2, 128>}]} {
    %c0 = arith.constant 0 : index
    %c0_0 = arith.constant 0 : index
    %c0_1 = arith.constant 0 : index
    %0 = vector.load %arg1[%c0, %c0_0, %c0_1] : memref<2x16x4xf32, #tpu.memory_space<vmem>>, vector<2x16x4xf32>
    %c0_2 = arith.constant 0 : index
    %c0_3 = arith.constant 0 : index
    %1 = vector.load %arg2[%c0_2, %c0_3] : memref<2x5xf32, #tpu.memory_space<vmem>>, vector<2x5xf32>
    %c0_4 = arith.constant 0 : index
    %c0_5 = arith.constant 0 : index
    %2 = vector.load %arg3[%c0_4, %c0_5] : memref<20x32xbf16, #tpu.memory_space<vmem>>, vector<20x32xbf16>
    %c0_6 = arith.constant 0 : index
    %c0_7 = arith.constant 0 : index
    %3 = vector.load %arg5[%c0_6, %c0_7] : memref<160x32xbf16, #tpu.memory_space<vmem>>, vector<160x32xbf16>
    %c0_8 = arith.constant 0 : index
    %c0_9 = arith.constant 0 : index
    %4 = vector.load %arg7[%c0_8, %c0_9] : memref<256x64xbf16, #tpu.memory_space<vmem>>, vector<256x64xbf16>
    %c0_10 = arith.constant 0 : index
    %c0_11 = arith.constant 0 : index
    %5 = vector.load %arg9[%c0_10, %c0_11] : memref<5x64xbf16, #tpu.memory_space<vmem>>, vector<5x64xbf16>
    %c0_12 = arith.constant 0 : index
    %c0_13 = arith.constant 0 : index
    %6 = vector.load %arg11[%c0_12, %c0_13] : memref<64x128xbf16, #tpu.memory_space<vmem>>, vector<64x128xbf16>
    %7 = vector.extract_strided_slice %0 {offsets = [0, 0, 0], sizes = [2, 12, 4], strides = [1, 1, 1]} : vector<2x16x4xf32> to vector<2x12x4xf32>
    %8 = vector.extract_strided_slice %0 {offsets = [0, 1, 0], sizes = [2, 12, 4], strides = [1, 1, 1]} : vector<2x16x4xf32> to vector<2x12x4xf32>
    %9 = vector.extract_strided_slice %0 {offsets = [0, 2, 0], sizes = [2, 12, 4], strides = [1, 1, 1]} : vector<2x16x4xf32> to vector<2x12x4xf32>
    %10 = vector.extract_strided_slice %0 {offsets = [0, 3, 0], sizes = [2, 12, 4], strides = [1, 1, 1]} : vector<2x16x4xf32> to vector<2x12x4xf32>
    %11 = vector.extract_strided_slice %0 {offsets = [0, 4, 0], sizes = [2, 12, 4], strides = [1, 1, 1]} : vector<2x16x4xf32> to vector<2x12x4xf32>
    %12 = tpu.concatenate %7, %8, %9, %10, %11 in 2 : vector<2x12x4xf32>, vector<2x12x4xf32>, vector<2x12x4xf32>, vector<2x12x4xf32>, vector<2x12x4xf32> -> vector<2x12x20xf32>
    %13 = vector.extract_strided_slice %12 {offsets = [0, 0, 0], sizes = [1, 12, 20], strides = [1, 1, 1]} : vector<2x12x20xf32> to vector<1x12x20xf32>
    %14 = vector.shape_cast %13 : vector<1x12x20xf32> to vector<12x20xf32>
    %15 = vector.extract_strided_slice %12 {offsets = [1, 0, 0], sizes = [1, 12, 20], strides = [1, 1, 1]} : vector<2x12x20xf32> to vector<1x12x20xf32>
    %16 = vector.shape_cast %15 : vector<1x12x20xf32> to vector<12x20xf32>
    %17 = tpu.concatenate %14, %16 in 0 : vector<12x20xf32>, vector<12x20xf32> -> vector<24x20xf32>
    %18 = arith.truncf %17 : vector<24x20xf32> to vector<24x20xbf16>
    %cst = arith.constant dense<0.000000e+00> : vector<24x32xf32>
    %19 = tpu.matmul %18, %2, %cst {dimension_numbers = #tpu.dot_dimension_numbers<[1], [0], [0], [1], [0, 0, 1, 1], [], []>} : vector<24x20xbf16>, vector<20x32xbf16>, vector<24x32xf32> -> vector<24x32xf32>
    %c0_14 = arith.constant 0 : index
    %c0_15 = arith.constant 0 : index
    %20 = vector.load %arg4[%c0_14, %c0_15] : memref<1x32xf32, #tpu.memory_space<vmem>>, vector<1x32xf32>
    %21 = vector.broadcast %20 : vector<1x32xf32> to vector<24x32xf32>
    %22 = arith.addf %19, %21 : vector<24x32xf32>
    %cst_16 = arith.constant 0.000000e+00 : f32
    %23 = vector.broadcast %cst_16 : f32 to vector<24x32xf32>
    %24 = arith.subf %23, %22 : vector<24x32xf32>
    %25 = math.exp %24 : vector<24x32xf32>
    %cst_17 = arith.constant 1.000000e+00 : f32
    %26 = vector.broadcast %cst_17 : f32 to vector<24x32xf32>
    %27 = arith.addf %26, %25 : vector<24x32xf32>
    %28 = tpu.reciprocal %27 {approx = true} : vector<24x32xf32> -> vector<24x32xf32>
    %29 = arith.mulf %22, %28 : vector<24x32xf32>
    %30 = vector.extract_strided_slice %29 {offsets = [0, 0], sizes = [8, 32], strides = [1, 1]} : vector<24x32xf32> to vector<8x32xf32>
    %31 = vector.extract_strided_slice %29 {offsets = [1, 0], sizes = [8, 32], strides = [1, 1]} : vector<24x32xf32> to vector<8x32xf32>
    %32 = vector.extract_strided_slice %29 {offsets = [2, 0], sizes = [8, 32], strides = [1, 1]} : vector<24x32xf32> to vector<8x32xf32>
    %33 = vector.extract_strided_slice %29 {offsets = [3, 0], sizes = [8, 32], strides = [1, 1]} : vector<24x32xf32> to vector<8x32xf32>
    %34 = vector.extract_strided_slice %29 {offsets = [4, 0], sizes = [8, 32], strides = [1, 1]} : vector<24x32xf32> to vector<8x32xf32>
    %35 = tpu.concatenate %30, %31, %32, %33, %34 in 1 : vector<8x32xf32>, vector<8x32xf32>, vector<8x32xf32>, vector<8x32xf32>, vector<8x32xf32> -> vector<8x160xf32>
    %36 = vector.extract_strided_slice %29 {offsets = [12, 0], sizes = [8, 32], strides = [1, 1]} : vector<24x32xf32> to vector<8x32xf32>
    %37 = vector.extract_strided_slice %29 {offsets = [13, 0], sizes = [8, 32], strides = [1, 1]} : vector<24x32xf32> to vector<8x32xf32>
    %38 = vector.extract_strided_slice %29 {offsets = [14, 0], sizes = [8, 32], strides = [1, 1]} : vector<24x32xf32> to vector<8x32xf32>
    %39 = vector.extract_strided_slice %29 {offsets = [15, 0], sizes = [8, 32], strides = [1, 1]} : vector<24x32xf32> to vector<8x32xf32>
    %40 = vector.extract_strided_slice %29 {offsets = [16, 0], sizes = [8, 32], strides = [1, 1]} : vector<24x32xf32> to vector<8x32xf32>
    %41 = tpu.concatenate %36, %37, %38, %39, %40 in 1 : vector<8x32xf32>, vector<8x32xf32>, vector<8x32xf32>, vector<8x32xf32>, vector<8x32xf32> -> vector<8x160xf32>
    %42 = tpu.concatenate %35, %41 in 0 : vector<8x160xf32>, vector<8x160xf32> -> vector<16x160xf32>
    %43 = arith.truncf %42 : vector<16x160xf32> to vector<16x160xbf16>
    %cst_18 = arith.constant dense<0.000000e+00> : vector<16x32xf32>
    %44 = tpu.matmul %43, %3, %cst_18 {dimension_numbers = #tpu.dot_dimension_numbers<[1], [0], [0], [1], [0, 0, 1, 1], [], []>} : vector<16x160xbf16>, vector<160x32xbf16>, vector<16x32xf32> -> vector<16x32xf32>
    %c0_19 = arith.constant 0 : index
    %c0_20 = arith.constant 0 : index
    %45 = vector.load %arg6[%c0_19, %c0_20] : memref<1x32xf32, #tpu.memory_space<vmem>>, vector<1x32xf32>
    %46 = vector.broadcast %45 : vector<1x32xf32> to vector<16x32xf32>
    %47 = arith.addf %44, %46 : vector<16x32xf32>
    %cst_21 = arith.constant 0.000000e+00 : f32
    %48 = vector.broadcast %cst_21 : f32 to vector<16x32xf32>
    %49 = arith.subf %48, %47 : vector<16x32xf32>
    %50 = math.exp %49 : vector<16x32xf32>
    %cst_22 = arith.constant 1.000000e+00 : f32
    %51 = vector.broadcast %cst_22 : f32 to vector<16x32xf32>
    %52 = arith.addf %51, %50 : vector<16x32xf32>
    %53 = tpu.reciprocal %52 {approx = true} : vector<16x32xf32> -> vector<16x32xf32>
    %54 = arith.mulf %47, %53 : vector<16x32xf32>
    %55 = vector.extract_strided_slice %54 {offsets = [0, 0], sizes = [1, 32], strides = [1, 1]} : vector<16x32xf32> to vector<1x32xf32>
    %56 = vector.extract_strided_slice %54 {offsets = [1, 0], sizes = [1, 32], strides = [1, 1]} : vector<16x32xf32> to vector<1x32xf32>
    %57 = vector.extract_strided_slice %54 {offsets = [2, 0], sizes = [1, 32], strides = [1, 1]} : vector<16x32xf32> to vector<1x32xf32>
    %58 = vector.extract_strided_slice %54 {offsets = [3, 0], sizes = [1, 32], strides = [1, 1]} : vector<16x32xf32> to vector<1x32xf32>
    %59 = vector.extract_strided_slice %54 {offsets = [4, 0], sizes = [1, 32], strides = [1, 1]} : vector<16x32xf32> to vector<1x32xf32>
    %60 = vector.extract_strided_slice %54 {offsets = [5, 0], sizes = [1, 32], strides = [1, 1]} : vector<16x32xf32> to vector<1x32xf32>
    %61 = vector.extract_strided_slice %54 {offsets = [6, 0], sizes = [1, 32], strides = [1, 1]} : vector<16x32xf32> to vector<1x32xf32>
    %62 = vector.extract_strided_slice %54 {offsets = [7, 0], sizes = [1, 32], strides = [1, 1]} : vector<16x32xf32> to vector<1x32xf32>
    %63 = tpu.concatenate %55, %56, %57, %58, %59, %60, %61, %62 in 1 : vector<1x32xf32>, vector<1x32xf32>, vector<1x32xf32>, vector<1x32xf32>, vector<1x32xf32>, vector<1x32xf32>, vector<1x32xf32>, vector<1x32xf32> -> vector<1x256xf32>
    %64 = vector.extract_strided_slice %54 {offsets = [8, 0], sizes = [1, 32], strides = [1, 1]} : vector<16x32xf32> to vector<1x32xf32>
    %65 = vector.extract_strided_slice %54 {offsets = [9, 0], sizes = [1, 32], strides = [1, 1]} : vector<16x32xf32> to vector<1x32xf32>
    %66 = vector.extract_strided_slice %54 {offsets = [10, 0], sizes = [1, 32], strides = [1, 1]} : vector<16x32xf32> to vector<1x32xf32>
    %67 = vector.extract_strided_slice %54 {offsets = [11, 0], sizes = [1, 32], strides = [1, 1]} : vector<16x32xf32> to vector<1x32xf32>
    %68 = vector.extract_strided_slice %54 {offsets = [12, 0], sizes = [1, 32], strides = [1, 1]} : vector<16x32xf32> to vector<1x32xf32>
    %69 = vector.extract_strided_slice %54 {offsets = [13, 0], sizes = [1, 32], strides = [1, 1]} : vector<16x32xf32> to vector<1x32xf32>
    %70 = vector.extract_strided_slice %54 {offsets = [14, 0], sizes = [1, 32], strides = [1, 1]} : vector<16x32xf32> to vector<1x32xf32>
    %71 = vector.extract_strided_slice %54 {offsets = [15, 0], sizes = [1, 32], strides = [1, 1]} : vector<16x32xf32> to vector<1x32xf32>
    %72 = tpu.concatenate %64, %65, %66, %67, %68, %69, %70, %71 in 1 : vector<1x32xf32>, vector<1x32xf32>, vector<1x32xf32>, vector<1x32xf32>, vector<1x32xf32>, vector<1x32xf32>, vector<1x32xf32>, vector<1x32xf32> -> vector<1x256xf32>
    %73 = tpu.concatenate %63, %72 in 0 : vector<1x256xf32>, vector<1x256xf32> -> vector<2x256xf32>
    %74 = arith.truncf %73 : vector<2x256xf32> to vector<2x256xbf16>
    %cst_23 = arith.constant dense<0.000000e+00> : vector<2x64xf32>
    %75 = tpu.matmul %74, %4, %cst_23 {dimension_numbers = #tpu.dot_dimension_numbers<[1], [0], [0], [1], [0, 0, 1, 1], [], []>} : vector<2x256xbf16>, vector<256x64xbf16>, vector<2x64xf32> -> vector<2x64xf32>
    %c0_24 = arith.constant 0 : index
    %c0_25 = arith.constant 0 : index
    %76 = vector.load %arg8[%c0_24, %c0_25] : memref<1x64xf32, #tpu.memory_space<vmem>>, vector<1x64xf32>
    %77 = vector.broadcast %76 : vector<1x64xf32> to vector<2x64xf32>
    %78 = arith.addf %75, %77 : vector<2x64xf32>
    %79 = arith.truncf %1 : vector<2x5xf32> to vector<2x5xbf16>
    %cst_26 = arith.constant dense<0.000000e+00> : vector<2x64xf32>
    %80 = tpu.matmul %79, %5, %cst_26 {dimension_numbers = #tpu.dot_dimension_numbers<[1], [0], [0], [1], [0, 0, 1, 1], [], []>} : vector<2x5xbf16>, vector<5x64xbf16>, vector<2x64xf32> -> vector<2x64xf32>
    %c0_27 = arith.constant 0 : index
    %c0_28 = arith.constant 0 : index
    %81 = vector.load %arg10[%c0_27, %c0_28] : memref<1x64xf32, #tpu.memory_space<vmem>>, vector<1x64xf32>
    %82 = vector.broadcast %81 : vector<1x64xf32> to vector<2x64xf32>
    %83 = arith.addf %80, %82 : vector<2x64xf32>
    %84 = arith.mulf %78, %83 : vector<2x64xf32>
    %cst_29 = arith.constant 0.000000e+00 : f32
    %85 = vector.broadcast %cst_29 : f32 to vector<2x64xf32>
    %86 = arith.subf %85, %84 : vector<2x64xf32>
    %87 = math.exp %86 : vector<2x64xf32>
    %cst_30 = arith.constant 1.000000e+00 : f32
    %88 = vector.broadcast %cst_30 : f32 to vector<2x64xf32>
    %89 = arith.addf %88, %87 : vector<2x64xf32>
    %90 = tpu.reciprocal %89 {approx = true} : vector<2x64xf32> -> vector<2x64xf32>
    %91 = arith.mulf %84, %90 : vector<2x64xf32>
    %92 = arith.truncf %91 : vector<2x64xf32> to vector<2x64xbf16>
    %cst_31 = arith.constant dense<0.000000e+00> : vector<2x128xf32>
    %93 = tpu.matmul %92, %6, %cst_31 {dimension_numbers = #tpu.dot_dimension_numbers<[1], [0], [0], [1], [0, 0, 1, 1], [], []>} : vector<2x64xbf16>, vector<64x128xbf16>, vector<2x128xf32> -> vector<2x128xf32>
    %c0_32 = arith.constant 0 : index
    %c0_33 = arith.constant 0 : index
    %94 = vector.load %arg12[%c0_32, %c0_33] : memref<1x128xf32, #tpu.memory_space<vmem>>, vector<1x128xf32>
    %95 = vector.broadcast %94 : vector<1x128xf32> to vector<2x128xf32>
    %96 = arith.addf %93, %95 : vector<2x128xf32>
    %c0_34 = arith.constant 0 : index
    %c0_35 = arith.constant 0 : index
    %97 = vector.load %arg13[%c0_34, %c0_35] : memref<2x128xf32, #tpu.memory_space<vmem>>, vector<2x128xf32>
    tpu.vector_store %arg13[%c0_34, %c0_35], %96 {strides = array<i32>} : memref<2x128xf32, #tpu.memory_space<vmem>>, vector<2x128xf32>,
    return
  }
  func.func @transform_0(%arg0: i32) -> (i32, i32, i32) {
    %c0_i32 = arith.constant 0 : i32
    %c0_i32_0 = arith.constant 0 : i32
    %c0_i32_1 = arith.constant 0 : i32
    return %arg0, %c0_i32, %c0_i32_0 : i32, i32, i32
  }
  func.func @transform_1(%arg0: i32) -> (i32, i32) {
    %c0_i32 = arith.constant 0 : i32
    %c0_i32_0 = arith.constant 0 : i32
    return %arg0, %c0_i32 : i32, i32
  }
  func.func @transform_2(%arg0: i32) -> (i32, i32) {
    %c0_i32 = arith.constant 0 : i32
    %c0_i32_0 = arith.constant 0 : i32
    %c0_i32_1 = arith.constant 0 : i32
    return %c0_i32, %c0_i32_0 : i32, i32
  }
  func.func @transform_3(%arg0: i32) -> (i32, i32) {
    %c0_i32 = arith.constant 0 : i32
    %c0_i32_0 = arith.constant 0 : i32
    %c0_i32_1 = arith.constant 0 : i32
    return %c0_i32, %c0_i32_0 : i32, i32
  }
  func.func @transform_4(%arg0: i32) -> (i32, i32) {
    %c0_i32 = arith.constant 0 : i32
    %c0_i32_0 = arith.constant 0 : i32
    %c0_i32_1 = arith.constant 0 : i32
    return %c0_i32, %c0_i32_0 : i32, i32
  }
  func.func @transform_5(%arg0: i32) -> (i32, i32) {
    %c0_i32 = arith.constant 0 : i32
    %c0_i32_0 = arith.constant 0 : i32
    %c0_i32_1 = arith.constant 0 : i32
    return %c0_i32, %c0_i32_0 : i32, i32
  }
  func.func @transform_6(%arg0: i32) -> (i32, i32) {
    %c0_i32 = arith.constant 0 : i32
    %c0_i32_0 = arith.constant 0 : i32
    %c0_i32_1 = arith.constant 0 : i32
    return %c0_i32, %c0_i32_0 : i32, i32
  }
  func.func @transform_7(%arg0: i32) -> (i32, i32) {
    %c0_i32 = arith.constant 0 : i32
    %c0_i32_0 = arith.constant 0 : i32
    %c0_i32_1 = arith.constant 0 : i32
    return %c0_i32, %c0_i32_0 : i32, i32
  }
  func.func @transform_8(%arg0: i32) -> (i32, i32) {
    %c0_i32 = arith.constant 0 : i32
    %c0_i32_0 = arith.constant 0 : i32
    %c0_i32_1 = arith.constant 0 : i32
    return %c0_i32, %c0_i32_0 : i32, i32
  }
  func.func @transform_9(%arg0: i32) -> (i32, i32) {
    %c0_i32 = arith.constant 0 : i32
    %c0_i32_0 = arith.constant 0 : i32
    %c0_i32_1 = arith.constant 0 : i32
    return %c0_i32, %c0_i32_0 : i32, i32
  }
  func.func @transform_10(%arg0: i32) -> (i32, i32) {
    %c0_i32 = arith.constant 0 : i32
    %c0_i32_0 = arith.constant 0 : i32
    %c0_i32_1 = arith.constant 0 : i32
    return %c0_i32, %c0_i32_0 : i32, i32
  }
  func.func @transform_11(%arg0: i32) -> (i32, i32) {
    %c0_i32 = arith.constant 0 : i32
    %c0_i32_0 = arith.constant 0 : i32
    %c0_i32_1 = arith.constant 0 : i32
    return %c0_i32, %c0_i32_0 : i32, i32
  }
  func.func @transform_12(%arg0: i32) -> (i32, i32) {
    %c0_i32 = arith.constant 0 : i32
    %c0_i32_0 = arith.constant 0 : i32
    return %arg0, %c0_i32 : i32, i32
  }
}

</mosaic_0001>

<llo_original>
// kernel: tpu_custom_call.1
$region0: #{tpu_custom_call.1}
  #allocation0 [shape = 'u32[]', space=smem, size = 0x4, offset = 0x4, fixed_abs, tag = 'smem constant byte address 0x4 - core index']
  #allocation1 [shape = 'u32[144,128]{1,0:T(1,128)}', space=vmem, size = 0x12000, scoped, tag = 'internal scratch']
  %s0 = inlined_call_operand.vmem [shape: f32[2,16,4], index: 0, kind: input, shape index: {}]
  %s1 = inlined_call_operand.vmem [shape: f32[2,5], index: 1, kind: input, shape index: {}]
  %s2 = inlined_call_operand.vmem [shape: bf16[20,32], index: 2, kind: input, shape index: {}]
  %s3 = inlined_call_operand.vmem [shape: f32[1,32], index: 3, kind: input, shape index: {}]
  %s4 = inlined_call_operand.vmem [shape: bf16[160,32], index: 4, kind: input, shape index: {}]
  %s5 = inlined_call_operand.vmem [shape: f32[1,32], index: 5, kind: input, shape index: {}]
  %s6 = inlined_call_operand.vmem [shape: bf16[256,64], index: 6, kind: input, shape index: {}]
  %s7 = inlined_call_operand.vmem [shape: f32[1,64], index: 7, kind: input, shape index: {}]
  %s8 = inlined_call_operand.vmem [shape: bf16[5,64], index: 8, kind: input, shape index: {}]
  %s9 = inlined_call_operand.vmem [shape: f32[1,64], index: 9, kind: input, shape index: {}]
  %s10 = inlined_call_operand.vmem [shape: bf16[64,128], index: 10, kind: input, shape index: {}]
  %s11 = inlined_call_operand.vmem [shape: f32[1,128], index: 11, kind: input, shape index: {}]
  %s12 = inlined_call_operand.hbm [shape: f32[2,128], index: 12, kind: output, shape index: {}]
  %s13 = sld [smem:[#allocation0]]
  $region58: #{tpu_custom_call.1} parent=0
    _
  %s15 = ssub.s32 1, %s13
  %s16 = scalar_select 0, %s15, %s13
  $region1: #{tpu_custom_call.1} parent=0
    #allocation2 [shape = 'u8[1024]{0}', space=vmem, size = 0x400, scoped, tag = 'output window, operand 0, single buffered']
    #allocation3 [shape = 's32[1]{0}', space=sflag, size = 0x4, scoped, tag = 'scoped memory for tpu_custom_call.1']
    %17 = vsyncpa [#allocation3], 0
    // Predicated region
    $region2: #{tpu_custom_call.1} parent=1 // pred_check
      _
    $region3: #{tpu_custom_call.1} parent=1 // pred_check_branch
      %19 = sbr.rel (0) target = $region5
    $region4: #{tpu_custom_call.1} parent=1 // pred_region
      _
    $region5: #{tpu_custom_call.1} parent=1 // pred_fallthru
      _
    // Predicated region
    $region6: #{tpu_custom_call.1} parent=1 // pred_check
      _
    $region7: #{tpu_custom_call.1} parent=1 // pred_check_branch
      %21 = sbr.rel (0) target = $region9
    $region8: #{tpu_custom_call.1} parent=1 // pred_region
      _
    $region9: #{tpu_custom_call.1} parent=1 // pred_fallthru
      _
    // Predicated region
    $region10: #{tpu_custom_call.1} parent=1 // pred_check
      _
    $region11: #{tpu_custom_call.1} parent=1 // pred_check_branch
      %23 = sbr.rel (0) target = $region13
    $region12: #{tpu_custom_call.1} parent=1 // pred_region
      _
    $region13: #{tpu_custom_call.1} parent=1 // pred_fallthru
      _
    // Predicated region
    $region14: #{tpu_custom_call.1} parent=1 // pred_check
      _
    $region15: #{tpu_custom_call.1} parent=1 // pred_check_branch
      %25 = sbr.rel (0) target = $region17
    $region16: #{tpu_custom_call.1} parent=1 // pred_region
      _
    $region17: #{tpu_custom_call.1} parent=1 // pred_fallthru
      _
    // Predicated region
    $region18: #{tpu_custom_call.1} parent=1 // pred_check
      _
    $region19: #{tpu_custom_call.1} parent=1 // pred_check_branch
      %27 = sbr.rel (0) target = $region21
    $region20: #{tpu_custom_call.1} parent=1 // pred_region
      _
    $region21: #{tpu_custom_call.1} parent=1 // pred_fallthru
      _
    // Predicated region
    $region22: #{tpu_custom_call.1} parent=1 // pred_check
      _
    $region23: #{tpu_custom_call.1} parent=1 // pred_check_branch
      %29 = sbr.rel (0) target = $region25
    $region24: #{tpu_custom_call.1} parent=1 // pred_region
      _
    $region25: #{tpu_custom_call.1} parent=1 // pred_fallthru
      _
    // Predicated region
    $region26: #{tpu_custom_call.1} parent=1 // pred_check
      _
    $region27: #{tpu_custom_call.1} parent=1 // pred_check_branch
      %31 = sbr.rel (0) target = $region29
    $region28: #{tpu_custom_call.1} parent=1 // pred_region
      _
    $region29: #{tpu_custom_call.1} parent=1 // pred_fallthru
      _
    // Predicated region
    $region30: #{tpu_custom_call.1} parent=1 // pred_check
      _
    $region31: #{tpu_custom_call.1} parent=1 // pred_check_branch
      %33 = sbr.rel (0) target = $region33
    $region32: #{tpu_custom_call.1} parent=1 // pred_region
      _
    $region33: #{tpu_custom_call.1} parent=1 // pred_fallthru
      _
    // Predicated region
    $region34: #{tpu_custom_call.1} parent=1 // pred_check
      _
    $region35: #{tpu_custom_call.1} parent=1 // pred_check_branch
      %35 = sbr.rel (0) target = $region37
    $region36: #{tpu_custom_call.1} parent=1 // pred_region
      _
    $region37: #{tpu_custom_call.1} parent=1 // pred_fallthru
      _
    // Predicated region
    $region38: #{tpu_custom_call.1} parent=1 // pred_check
      _
    $region39: #{tpu_custom_call.1} parent=1 // pred_check_branch
      %37 = sbr.rel (0) target = $region41
    $region40: #{tpu_custom_call.1} parent=1 // pred_region
      _
    $region41: #{tpu_custom_call.1} parent=1 // pred_fallthru
      _
    // Predicated region
    $region42: #{tpu_custom_call.1} parent=1 // pred_check
      _
    $region43: #{tpu_custom_call.1} parent=1 // pred_check_branch
      %39 = sbr.rel (0) target = $region45
    $region44: #{tpu_custom_call.1} parent=1 // pred_region
      _
    $region45: #{tpu_custom_call.1} parent=1 // pred_fallthru
      _
    // Predicated region
    $region46: #{tpu_custom_call.1} parent=1 // pred_check
      _
    $region47: #{tpu_custom_call.1} parent=1 // pred_check_branch
      %41 = sbr.rel (0) target = $region49
    $region48: #{tpu_custom_call.1} parent=1 // pred_region
      _
    $region49: #{tpu_custom_call.1} parent=1 // pred_fallthru
      _
    %v43 = vld [vmem:[%s0] sm:$0xff]
    %v44 = vld [vmem:[%s0 + $0x8] sm:$0xff]
    %v45 = vld [vmem:[%s0 + $0x10] sm:$0xff]
    %v46 = vld [vmem:[%s0 + $0x18] sm:$0xff]
    %v47 = vld [vmem:[%s1] sm:$0x3]
    %v48 = vld [vmem:[%s2] sm:$0xf]
    %v49 = vld [vmem:[%s2 + $0x4] sm:$0xf]
    %v50 = vld [vmem:[%s2 + $0x8] sm:$0x3]
    %v51 = vld [vmem:[%s4] sm:$0xf]
    %v52 = vld [vmem:[%s4 + $0x4] sm:$0xf]
    %v53 = vld [vmem:[%s4 + $0x8] sm:$0xf]
    %v54 = vld [vmem:[%s4 + $0xc] sm:$0xf]
    %v55 = vld [vmem:[%s4 + $0x10] sm:$0xf]
    %v56 = vld [vmem:[%s4 + $0x14] sm:$0xf]
    %v57 = vld [vmem:[%s4 + $0x18] sm:$0xf]
    %v58 = vld [vmem:[%s4 + $0x1c] sm:$0xf]
    %v59 = vld [vmem:[%s4 + $0x20] sm:$0xf]
    %v60 = vld [vmem:[%s4 + $0x24] sm:$0xf]
    %v61 = vld [vmem:[%s4 + $0x28] sm:$0xf]
    %v62 = vld [vmem:[%s4 + $0x2c] sm:$0xf]
    %v63 = vld [vmem:[%s4 + $0x30] sm:$0xf]
    %v64 = vld [vmem:[%s4 + $0x34] sm:$0xf]
    %v65 = vld [vmem:[%s4 + $0x38] sm:$0xf]
    %v66 = vld [vmem:[%s4 + $0x3c] sm:$0xf]
    %v67 = vld [vmem:[%s4 + $0x40] sm:$0xf]
    %v68 = vld [vmem:[%s4 + $0x44] sm:$0xf]
    %v69 = vld [vmem:[%s4 + $0x48] sm:$0xf]
    %v70 = vld [vmem:[%s4 + $0x4c] sm:$0xf]
    %v71 = vld [vmem:[%s6] sm:$0xf]
    %v72 = vld [vmem:[%s6 + $0x4] sm:$0xf]
    %v73 = vld [vmem:[%s6 + $0x8] sm:$0xf]
    %v74 = vld [vmem:[%s6 + $0xc] sm:$0xf]
    %v75 = vld [vmem:[%s6 + $0x10] sm:$0xf]
    %v76 = vld [vmem:[%s6 + $0x14] sm:$0xf]
    %v77 = vld [vmem:[%s6 + $0x18] sm:$0xf]
    %v78 = vld [vmem:[%s6 + $0x1c] sm:$0xf]
    %v79 = vld [vmem:[%s6 + $0x20] sm:$0xf]
    %v80 = vld [vmem:[%s6 + $0x24] sm:$0xf]
    %v81 = vld [vmem:[%s6 + $0x28] sm:$0xf]
    %v82 = vld [vmem:[%s6 + $0x2c] sm:$0xf]
    %v83 = vld [vmem:[%s6 + $0x30] sm:$0xf]
    %v84 = vld [vmem:[%s6 + $0x34] sm:$0xf]
    %v85 = vld [vmem:[%s6 + $0x38] sm:$0xf]
    %v86 = vld [vmem:[%s6 + $0x3c] sm:$0xf]
    %v87 = vld [vmem:[%s6 + $0x40] sm:$0xf]
    %v88 = vld [vmem:[%s6 + $0x44] sm:$0xf]
    %v89 = vld [vmem:[%s6 + $0x48] sm:$0xf]
    %v90 = vld [vmem:[%s6 + $0x4c] sm:$0xf]
    %v91 = vld [vmem:[%s6 + $0x50] sm:$0xf]
    %v92 = vld [vmem:[%s6 + $0x54] sm:$0xf]
    %v93 = vld [vmem:[%s6 + $0x58] sm:$0xf]
    %v94 = vld [vmem:[%s6 + $0x5c] sm:$0xf]
    %v95 = vld [vmem:[%s6 + $0x60] sm:$0xf]
    %v96 = vld [vmem:[%s6 + $0x64] sm:$0xf]
    %v97 = vld [vmem:[%s6 + $0x68] sm:$0xf]
    %v98 = vld [vmem:[%s6 + $0x6c] sm:$0xf]
    %v99 = vld [vmem:[%s6 + $0x70] sm:$0xf]
    %v100 = vld [vmem:[%s6 + $0x74] sm:$0xf]
    %v101 = vld [vmem:[%s6 + $0x78] sm:$0xf]
    %v102 = vld [vmem:[%s6 + $0x7c] sm:$0xf]
    %v103 = vld [vmem:[%s8] sm:$0x7]
    %v104 = vld [vmem:[%s10] sm:$0xf]
    %v105 = vld [vmem:[%s10 + $0x4] sm:$0xf]
    %v106 = vld [vmem:[%s10 + $0x8] sm:$0xf]
    %v107 = vld [vmem:[%s10 + $0xc] sm:$0xf]
    %v108 = vld [vmem:[%s10 + $0x10] sm:$0xf]
    %v109 = vld [vmem:[%s10 + $0x14] sm:$0xf]
    %v110 = vld [vmem:[%s10 + $0x18] sm:$0xf]
    %v111 = vld [vmem:[%s10 + $0x1c] sm:$0xf]
    %vm116 = vcmask 1046528
    %v117 = vrot.slane %v43, 1
    %v118 = vrot.slane %v44, 1
    %v119 = vsel %vm116, %v117, %v118
    %v120 = vrot.slane %v45, 1
    %v121 = vrot.slane %v46, 1
    %v122 = vsel %vm116, %v120, %v121
    %123 = vrot.lane.b32.xlu0 %v119, 4
    %v124 = vpop.permute.xlu0 %123
    %125 = vrot.lane.b32.xlu0 %v118, 4
    %v126 = vpop.permute.xlu0 %125
    %127 = vrot.lane.b32.xlu0 %v122, 4
    %v128 = vpop.permute.xlu0 %127
    %129 = vrot.lane.b32.xlu0 %v121, 4
    %v130 = vpop.permute.xlu0 %129
    %vm135 = vcmask 1045504
    %v136 = vrot.slane %v43, 2
    %v137 = vrot.slane %v44, 2
    %v138 = vsel %vm135, %v136, %v137
    %v139 = vrot.slane %v45, 2
    %v140 = vrot.slane %v46, 2
    %v141 = vsel %vm135, %v139, %v140
    %142 = vrot.lane.b32.xlu0 %v138, 8
    %v143 = vpop.permute.xlu0 %142
    %144 = vrot.lane.b32.xlu0 %v137, 8
    %v145 = vpop.permute.xlu0 %144
    %146 = vrot.lane.b32.xlu0 %v141, 8
    %v147 = vpop.permute.xlu0 %146
    %148 = vrot.lane.b32.xlu0 %v140, 8
    %v149 = vpop.permute.xlu0 %148
    %vm154 = vcmask 1044480
    %v155 = vrot.slane %v43, 3
    %v156 = vrot.slane %v44, 3
    %v157 = vsel %vm154, %v155, %v156
    %v158 = vrot.slane %v45, 3
    %v159 = vrot.slane %v46, 3
    %v160 = vsel %vm154, %v158, %v159
    %161 = vrot.lane.b32.xlu0 %v157, 12
    %v162 = vpop.permute.xlu0 %161
    %163 = vrot.lane.b32.xlu0 %v156, 12
    %v164 = vpop.permute.xlu0 %163
    %165 = vrot.lane.b32.xlu0 %v160, 12
    %v166 = vpop.permute.xlu0 %165
    %167 = vrot.lane.b32.xlu0 %v159, 12
    %v168 = vpop.permute.xlu0 %167
    %vm173 = vcmask 1043456
    %v174 = vrot.slane %v43, 4
    %v175 = vrot.slane %v44, 4
    %v176 = vsel %vm173, %v174, %v175
    %v177 = vrot.slane %v45, 4
    %v178 = vrot.slane %v46, 4
    %v179 = vsel %vm173, %v177, %v178
    %180 = vrot.lane.b32.xlu0 %v176, 16
    %v181 = vpop.permute.xlu0 %180
    %182 = vrot.lane.b32.xlu0 %v175, 16
    %v183 = vpop.permute.xlu0 %182
    %184 = vrot.lane.b32.xlu0 %v179, 16
    %v185 = vpop.permute.xlu0 %184
    %186 = vrot.lane.b32.xlu0 %v178, 16
    %v187 = vpop.permute.xlu0 %186
    %vm192 = vcmask 31744
    %v193 = vsel %vm192, %v43, %v124
    %v194 = vsel %vm192, %v44, %v126
    %v195 = vsel %vm192, %v45, %v128
    %v196 = vsel %vm192, %v46, %v130
    %vm197 = vcmask 64512
    %v198 = vsel %vm197, %v193, %v143
    %v199 = vsel %vm197, %v194, %v145
    %v200 = vsel %vm197, %v195, %v147
    %v201 = vsel %vm197, %v196, %v149
    %vm202 = vcmask 97280
    %v203 = vsel %vm202, %v198, %v162
    %v204 = vsel %vm202, %v199, %v164
    %v205 = vsel %vm202, %v200, %v166
    %v206 = vsel %vm202, %v201, %v168
    %vm207 = vcmask 130048
    %v208 = vsel %vm207, %v203, %v181
    %v209 = vsel %vm207, %v204, %v183
    %v210 = vsel %vm207, %v205, %v185
    %v211 = vsel %vm207, %v206, %v187
    %v214 = vrot.slane %v210, 4
    %v215 = vrot.slane %v211, 4
    %v216 = vsel %vm173, %v214, %v215
    %v219 = vsel %vm173, %v209, %v214
    %v220 = vpack.c.bf16 %v219, %v208
    %v221 = vpack.c.bf16 %v216, %v216
    %v222 = vld [vmem:[%s3] sm:$0x1]
    %v224 = vlaneseq
    %v225 = vshrl.u32 %v224, 7
    %v226 = vsub.s32 0, %v225
    %v227 = vrot.slane %v222, %v226
    %v232 = vunpack.c.l.b16 %v48
    %v233 = vunpack.c.l.b16 %v49
    %v234 = vunpack.c.l.b16 %v50
    %v235 = vpack.c.b16 %v233, %v232
    %v236 = vpack.c.b16 %v234, %v234
    %vm238 = vcmask 162816
    %v240 = vsel %vm238, %v220, 0
    %v243 = vsel %vm238, %v221, 0
    %vm245 = vcmask 1041408
    %v247 = vsel %vm245, %v236, 0
    %249 = vmatprep.subr.bf16.mxu0 0
    %250 = vmatpush1.bf16.msra.mxu0 0
    %251 = vmatprep.subr.bf16.mxu0 0
    %252 = vmatpush1.bf16.msra.mxu0 0
    %253 = vmatprep.subr.bf16.mxu0 0
    %254 = vmatpush1.bf16.msra.mxu0 0
    %255 = vmatprep.subr.bf16.mxu0 0
    %256 = vmatpush1.bf16.msra.mxu0 0
    %257 = vmatprep.subr.bf16.mxu0 0
    %258 = vmatpush1.bf16.msra.mxu0 0
    %259 = vmatprep.subr.bf16.mxu0 0
    %260 = vmatpush1.bf16.msra.mxu0 0
    %261 = vmatprep.subr.bf16.mxu0 0
    %262 = vmatpush1.bf16.msra.mxu0 %v247
    %263 = vmatprep.subr.bf16.mxu0 0
    %264 = vmatpush1.bf16.msra.mxu0 %v235
    %265 = vmatprep.subr.bf16.mxu0 0
    %266 = vmatpush2.bf16.msra.mxu0 0
    %267 = vmatprep.subr.bf16.mxu0 0
    %268 = vmatpush2.bf16.msra.mxu0 0
    %269 = vmatprep.subr.bf16.mxu0 0
    %270 = vmatpush2.bf16.msra.mxu0 0
    %271 = vmatprep.subr.bf16.mxu0 0
    %272 = vmatpush2.bf16.msra.mxu0 0
    %273 = vmatprep.subr.bf16.mxu0 0
    %274 = vmatpush2.bf16.msra.mxu0 0
    %275 = vmatprep.subr.bf16.mxu0 0
    %276 = vmatpush2.bf16.msra.mxu0 0
    %277 = vmatprep.subr.bf16.mxu0 0
    %278 = vmatpush2.bf16.msra.mxu0 0
    %279 = vmatprep.subr.bf16.mxu0 0
    %280 = vmatpush2.bf16.msra.mxu0 0
    %281 = vmatprep.mubr.bf16.mxu0 0
    %282 = vmatmul.mubr.bf16.gmra.mxu0 %v240
    %v283 = vpop.f32.mrf.mxu0
    %v284 = vadd.f32 %v227, %v283
    %v285 = vpop.f32.mrf.mxu0
    %v286 = vpop.f32.mrf.mxu0
    %v287 = vadd.f32 %v227, %v286
    %v288 = vpop.f32.mrf.mxu0
    %289 = vmatprep.mubr.bf16.mxu0 0
    %290 = vmatmul.mubr.bf16.gmra.mxu0 %v243
    %v291 = vpop.f32.mrf.mxu0
    %v292 = vadd.f32 %v227, %v291
    %v293 = vpop.f32.mrf.mxu0
    %v294 = vpop.f32.mrf.mxu0
    %v295 = vpop.f32.mrf.mxu0
    %296 = vdwg.mxu0
    %v297 = vsub.f32 0.0, %v284
    %v298 = vsub.f32 0.0, %v287
    %v299 = vsub.f32 0.0, %v292
    %v300 = vmul.f32 %v297, 1.442695
    %v301 = vpow.pop %v300
    %v302 = vmul.f32 %v298, 1.442695
    %v303 = vpow.pop %v302
    %v304 = vmul.f32 %v299, 1.442695
    %v305 = vpow.pop %v304
    %v306 = vadd.f32 %v301, 1.0
    %v307 = vadd.f32 %v303, 1.0
    %v308 = vadd.f32 %v305, 1.0
    %v309 = vrcp.pop %v306
    %v310 = vrcp.pop %v307
    %v311 = vrcp.pop %v308
    %v312 = vmul.f32 %v284, %v309
    %v313 = vmul.f32 %v287, %v310
    %v314 = vmul.f32 %v292, %v311
    %v317 = vrot.slane %v312, 1
    %v318 = vrot.slane %v313, 1
    %v319 = vsel %vm116, %v317, %v318
    %320 = vrot.lane.b32.xlu0 %v319, 32
    %v321 = vpop.permute.xlu0 %320
    %v323 = vrot.slane %v312, 2
    %v324 = vrot.slane %v313, 2
    %v325 = vsel %vm135, %v323, %v324
    %326 = vrot.lane.b32.xlu0 %v325, 64
    %v327 = vpop.permute.xlu0 %326
    %v329 = vrot.slane %v312, 3
    %v330 = vrot.slane %v313, 3
    %v331 = vsel %vm154, %v329, %v330
    %332 = vrot.lane.b32.xlu0 %v331, 96
    %v333 = vpop.permute.xlu0 %332
    %v335 = vrot.slane %v312, 4
    %v336 = vrot.slane %v313, 4
    %v337 = vsel %vm173, %v335, %v336
    %vm339 = vcmask 261120
    %v340 = vsel %vm339, %v312, %v321
    %vm341 = vcmask 523264
    %v342 = vsel %vm341, %v340, %v327
    %vm343 = vcmask 785408
    %v344 = vsel %vm343, %v342, %v333
    %v346 = vrot.slane %v314, 1
    %v347 = vsel %vm116, %v318, %v346
    %348 = vrot.lane.b32.xlu0 %v347, 32
    %v349 = vpop.permute.xlu0 %348
    %350 = vrot.lane.b32.xlu0 %v346, 32
    %v351 = vpop.permute.xlu0 %350
    %v354 = vrot.slane %v314, 2
    %v355 = vsel %vm135, %v324, %v354
    %356 = vrot.lane.b32.xlu0 %v355, 64
    %v357 = vpop.permute.xlu0 %356
    %358 = vrot.lane.b32.xlu0 %v354, 64
    %v359 = vpop.permute.xlu0 %358
    %v362 = vrot.slane %v314, 3
    %v363 = vsel %vm154, %v330, %v362
    %364 = vrot.lane.b32.xlu0 %v363, 96
    %v365 = vpop.permute.xlu0 %364
    %366 = vrot.lane.b32.xlu0 %v362, 96
    %v367 = vpop.permute.xlu0 %366
    %v370 = vrot.slane %v314, 4
    %v371 = vsel %vm339, %v313, %v349
    %v372 = vsel %vm339, %v314, %v351
    %v373 = vsel %vm341, %v371, %v357
    %v374 = vsel %vm341, %v372, %v359
    %v375 = vsel %vm343, %v373, %v365
    %v376 = vsel %vm343, %v374, %v367
    %v379 = vrot.slane %v375, 4
    %v380 = vrot.slane %v376, 4
    %v381 = vsel %vm173, %v379, %v380
    %v382 = vrot.slane %v370, 4
    %v383 = vsel %vm173, %v382, %v382
    %v386 = vpack.c.bf16 %v381, %v344
    %v387 = vpack.c.bf16 %v383, %v337
    %v388 = vld [vmem:[%s5] sm:$0x1]
    %v390 = vlaneseq
    %v391 = vshrl.u32 %v390, 7
    %v392 = vsub.s32 0, %v391
    %v393 = vrot.slane %v388, %v392
    %v415 = vunpack.c.l.b16 %v51
    %v416 = vunpack.c.l.b16 %v52
    %v417 = vunpack.c.l.b16 %v53
    %v418 = vunpack.c.l.b16 %v54
    %v419 = vunpack.c.l.b16 %v55
    %v420 = vunpack.c.l.b16 %v56
    %v421 = vunpack.c.l.b16 %v57
    %v422 = vunpack.c.l.b16 %v58
    %v423 = vunpack.c.l.b16 %v59
    %v424 = vunpack.c.l.b16 %v60
    %v425 = vunpack.c.l.b16 %v61
    %v426 = vunpack.c.l.b16 %v62
    %v427 = vunpack.c.l.b16 %v63
    %v428 = vunpack.c.l.b16 %v64
    %v429 = vunpack.c.l.b16 %v65
    %v430 = vunpack.c.l.b16 %v66
    %v431 = vunpack.c.l.b16 %v67
    %v432 = vunpack.c.l.b16 %v68
    %v433 = vunpack.c.l.b16 %v69
    %v434 = vunpack.c.l.b16 %v70
    %v435 = vpack.c.b16 %v416, %v415
    %v436 = vpack.c.b16 %v418, %v417
    %v437 = vpack.c.b16 %v420, %v419
    %v438 = vpack.c.b16 %v422, %v421
    %v439 = vpack.c.b16 %v424, %v423
    %v440 = vpack.c.b16 %v426, %v425
    %v441 = vpack.c.b16 %v428, %v427
    %v442 = vpack.c.b16 %v430, %v429
    %v443 = vpack.c.b16 %v432, %v431
    %v444 = vpack.c.b16 %v434, %v433
    %v456 = vsel %vm339, %v387, 0
    %458 = vmatprep.subr.bf16.mxu0 0
    %459 = vmatpush1.bf16.msra.mxu0 %v442
    %460 = vmatprep.subr.bf16.mxu0 0
    %461 = vmatpush1.bf16.msra.mxu0 %v441
    %462 = vmatprep.subr.bf16.mxu0 0
    %463 = vmatpush1.bf16.msra.mxu0 %v440
    %464 = vmatprep.subr.bf16.mxu0 0
    %465 = vmatpush1.bf16.msra.mxu0 %v439
    %466 = vmatprep.subr.bf16.mxu0 0
    %467 = vmatpush1.bf16.msra.mxu0 %v438
    %468 = vmatprep.subr.bf16.mxu0 0
    %469 = vmatpush1.bf16.msra.mxu0 %v437
    %470 = vmatprep.subr.bf16.mxu0 0
    %471 = vmatpush1.bf16.msra.mxu0 %v436
    %472 = vmatprep.subr.bf16.mxu0 0
    %473 = vmatpush1.bf16.msra.mxu0 %v435
    %474 = vmatprep.subr.bf16.mxu0 0
    %475 = vmatpush2.bf16.msra.mxu0 0
    %476 = vmatprep.subr.bf16.mxu0 0
    %477 = vmatpush2.bf16.msra.mxu0 0
    %478 = vmatprep.subr.bf16.mxu0 0
    %479 = vmatpush2.bf16.msra.mxu0 0
    %480 = vmatprep.subr.bf16.mxu0 0
    %481 = vmatpush2.bf16.msra.mxu0 0
    %482 = vmatprep.subr.bf16.mxu0 0
    %483 = vmatpush2.bf16.msra.mxu0 0
    %484 = vmatprep.subr.bf16.mxu0 0
    %485 = vmatpush2.bf16.msra.mxu0 0
    %486 = vmatprep.subr.bf16.mxu0 0
    %487 = vmatpush2.bf16.msra.mxu0 %v444
    %488 = vmatprep.subr.bf16.mxu0 0
    %489 = vmatpush2.bf16.msra.mxu0 %v443
    %490 = vmatprep.mubr.bf16.mxu0 %v456
    %491 = vmatmul.mubr.bf16.gmra.mxu0 %v386
    %v492 = vpop.f32.mrf.mxu0
    %v493 = vadd.f32 %v393, %v492
    %v494 = vpop.f32.mrf.mxu0
    %v495 = vpop.f32.mrf.mxu0
    %v496 = vadd.f32 %v393, %v495
    %v497 = vpop.f32.mrf.mxu0
    %498 = vdwg.mxu0
    %v499 = vsub.f32 0.0, %v493
    %v500 = vsub.f32 0.0, %v496
    %v501 = vmul.f32 %v499, 1.442695
    %v502 = vpow.pop %v501
    %v503 = vmul.f32 %v500, 1.442695
    %v504 = vpow.pop %v503
    %v505 = vadd.f32 %v502, 1.0
    %v506 = vadd.f32 %v504, 1.0
    %v507 = vrcp.pop %v505
    %v508 = vrcp.pop %v506
    %v509 = vmul.f32 %v493, %v507
    %v510 = vmul.f32 %v496, %v508
    %v512 = vrot.slane %v509, 1
    %513 = vrot.lane.b32.xlu0 %v512, 32
    %v514 = vpop.permute.xlu0 %513
    %v516 = vrot.slane %v509, 2
    %517 = vrot.lane.b32.xlu0 %v516, 64
    %v518 = vpop.permute.xlu0 %517
    %v520 = vrot.slane %v509, 3
    %521 = vrot.lane.b32.xlu0 %v520, 96
    %v522 = vpop.permute.xlu0 %521
    %v524 = vrot.slane %v509, 4
    %v526 = vrot.slane %v509, 5
    %527 = vrot.lane.b32.xlu0 %v526, 32
    %v528 = vpop.permute.xlu0 %527
    %v530 = vrot.slane %v509, 6
    %531 = vrot.lane.b32.xlu0 %v530, 64
    %v532 = vpop.permute.xlu0 %531
    %v534 = vrot.slane %v509, 7
    %535 = vrot.lane.b32.xlu0 %v534, 96
    %v536 = vpop.permute.xlu0 %535
    %v538 = vsel %vm339, %v509, %v514
    %v539 = vsel %vm341, %v538, %v518
    %v540 = vsel %vm343, %v539, %v522
    %v541 = vsel %vm339, %v524, %v528
    %v542 = vsel %vm341, %v541, %v532
    %v543 = vsel %vm343, %v542, %v536
    %v545 = vrot.slane %v510, 1
    %546 = vrot.lane.b32.xlu0 %v545, 32
    %v547 = vpop.permute.xlu0 %546
    %v549 = vrot.slane %v510, 2
    %550 = vrot.lane.b32.xlu0 %v549, 64
    %v551 = vpop.permute.xlu0 %550
    %v553 = vrot.slane %v510, 3
    %554 = vrot.lane.b32.xlu0 %v553, 96
    %v555 = vpop.permute.xlu0 %554
    %v557 = vrot.slane %v510, 4
    %v559 = vrot.slane %v510, 5
    %560 = vrot.lane.b32.xlu0 %v559, 32
    %v561 = vpop.permute.xlu0 %560
    %v563 = vrot.slane %v510, 6
    %564 = vrot.lane.b32.xlu0 %v563, 64
    %v565 = vpop.permute.xlu0 %564
    %v567 = vrot.slane %v510, 7
    %568 = vrot.lane.b32.xlu0 %v567, 96
    %v569 = vpop.permute.xlu0 %568
    %v571 = vsel %vm339, %v510, %v547
    %v572 = vsel %vm341, %v571, %v551
    %v573 = vsel %vm343, %v572, %v555
    %v574 = vsel %vm339, %v557, %v561
    %v575 = vsel %vm341, %v574, %v565
    %v576 = vsel %vm343, %v575, %v569
    %v579 = vrot.slane %v573, 7
    %v580 = vrot.slane %v576, 7
    %vm583 = vcmask 1040384
    %v584 = vsel %vm583, %v540, %v579
    %v585 = vsel %vm583, %v543, %v580
    %v586 = vpack.c.bf16 %v584, %v584
    %v587 = vpack.c.bf16 %v585, %v585
    %v588 = vld [vmem:[%s7] sm:$0x1]
    %v590 = vlaneseq
    %v591 = vshrl.u32 %v590, 7
    %v592 = vsub.s32 0, %v591
    %v593 = vrot.slane %v588, %v592
    %v627 = vunpack.c.l.b16 %v71
    %v628 = vunpack.c.l.b16 %v72
    %v629 = vunpack.c.l.b16 %v73
    %v630 = vunpack.c.l.b16 %v74
    %v631 = vunpack.c.l.b16 %v75
    %v632 = vunpack.c.l.b16 %v76
    %v633 = vunpack.c.l.b16 %v77
    %v634 = vunpack.c.l.b16 %v78
    %v635 = vunpack.c.l.b16 %v79
    %v636 = vunpack.c.l.b16 %v80
    %v637 = vunpack.c.l.b16 %v81
    %v638 = vunpack.c.l.b16 %v82
    %v639 = vunpack.c.l.b16 %v83
    %v640 = vunpack.c.l.b16 %v84
    %v641 = vunpack.c.l.b16 %v85
    %v642 = vunpack.c.l.b16 %v86
    %v643 = vunpack.c.l.b16 %v87
    %v644 = vunpack.c.l.b16 %v88
    %v645 = vunpack.c.l.b16 %v89
    %v646 = vunpack.c.l.b16 %v90
    %v647 = vunpack.c.l.b16 %v91
    %v648 = vunpack.c.l.b16 %v92
    %v649 = vunpack.c.l.b16 %v93
    %v650 = vunpack.c.l.b16 %v94
    %v651 = vunpack.c.l.b16 %v95
    %v652 = vunpack.c.l.b16 %v96
    %v653 = vunpack.c.l.b16 %v97
    %v654 = vunpack.c.l.b16 %v98
    %v655 = vunpack.c.l.b16 %v99
    %v656 = vunpack.c.l.b16 %v100
    %v657 = vunpack.c.l.b16 %v101
    %v658 = vunpack.c.l.b16 %v102
    %v659 = vpack.c.b16 %v628, %v627
    %v660 = vpack.c.b16 %v630, %v629
    %v661 = vpack.c.b16 %v632, %v631
    %v662 = vpack.c.b16 %v634, %v633
    %v663 = vpack.c.b16 %v636, %v635
    %v664 = vpack.c.b16 %v638, %v637
    %v665 = vpack.c.b16 %v640, %v639
    %v666 = vpack.c.b16 %v642, %v641
    %v667 = vpack.c.b16 %v644, %v643
    %v668 = vpack.c.b16 %v646, %v645
    %v669 = vpack.c.b16 %v648, %v647
    %v670 = vpack.c.b16 %v650, %v649
    %v671 = vpack.c.b16 %v652, %v651
    %v672 = vpack.c.b16 %v654, %v653
    %v673 = vpack.c.b16 %v656, %v655
    %v674 = vpack.c.b16 %v658, %v657
    %691 = vmatprep.subr.bf16.mxu0 0
    %692 = vmatpush1.bf16.msra.mxu0 %v666
    %693 = vmatprep.subr.bf16.mxu0 0
    %694 = vmatpush1.bf16.msra.mxu0 %v665
    %695 = vmatprep.subr.bf16.mxu0 0
    %696 = vmatpush1.bf16.msra.mxu0 %v664
    %697 = vmatprep.subr.bf16.mxu0 0
    %698 = vmatpush1.bf16.msra.mxu0 %v663
    %699 = vmatprep.subr.bf16.mxu0 0
    %700 = vmatpush1.bf16.msra.mxu0 %v662
    %701 = vmatprep.subr.bf16.mxu0 0
    %702 = vmatpush1.bf16.msra.mxu0 %v661
    %703 = vmatprep.subr.bf16.mxu0 0
    %704 = vmatpush1.bf16.msra.mxu0 %v660
    %705 = vmatprep.subr.bf16.mxu0 0
    %706 = vmatpush1.bf16.msra.mxu0 %v659
    %707 = vmatprep.subr.bf16.mxu0 0
    %708 = vmatpush2.bf16.msra.mxu0 %v674
    %709 = vmatprep.subr.bf16.mxu0 0
    %710 = vmatpush2.bf16.msra.mxu0 %v673
    %711 = vmatprep.subr.bf16.mxu0 0
    %712 = vmatpush2.bf16.msra.mxu0 %v672
    %713 = vmatprep.subr.bf16.mxu0 0
    %714 = vmatpush2.bf16.msra.mxu0 %v671
    %715 = vmatprep.subr.bf16.mxu0 0
    %716 = vmatpush2.bf16.msra.mxu0 %v670
    %717 = vmatprep.subr.bf16.mxu0 0
    %718 = vmatpush2.bf16.msra.mxu0 %v669
    %719 = vmatprep.subr.bf16.mxu0 0
    %720 = vmatpush2.bf16.msra.mxu0 %v668
    %721 = vmatprep.subr.bf16.mxu0 0
    %722 = vmatpush2.bf16.msra.mxu0 %v667
    %723 = vmatprep.mubr.bf16.mxu0 %v587
    %724 = vmatmul.mubr.bf16.gmra.mxu0 %v586
    %v725 = vpop.f32.mrf.mxu0
    %v726 = vadd.f32 %v593, %v725
    %v727 = vpop.f32.mrf.mxu0
    %v728 = vpop.f32.mrf.mxu0
    %v729 = vpop.f32.mrf.mxu0
    %730 = vdwg.mxu0
    %v731 = vpack.c.bf16 %v47, %v47
    %v732 = vld [vmem:[%s9] sm:$0x1]
    %v734 = vlaneseq
    %v735 = vshrl.u32 %v734, 7
    %v736 = vsub.s32 0, %v735
    %v737 = vrot.slane %v732, %v736
    %vm739 = vcmask 39936
    %v741 = vsel %vm739, %v731, 0
    %vm743 = vcmask 1042432
    %v744 = vsel %vm245, 4294967295, 65535
    %v745 = vsel %vm743, %v744, 0
    %v747 = vand.u32 %v103, %v745
    %749 = vmatprep.subr.bf16.mxu0 0
    %750 = vmatpush1.bf16.msra.mxu0 0
    %751 = vmatprep.subr.bf16.mxu0 0
    %752 = vmatpush1.bf16.msra.mxu0 0
    %753 = vmatprep.subr.bf16.mxu0 0
    %754 = vmatpush1.bf16.msra.mxu0 0
    %755 = vmatprep.subr.bf16.mxu0 0
    %756 = vmatpush1.bf16.msra.mxu0 0
    %757 = vmatprep.subr.bf16.mxu0 0
    %758 = vmatpush1.bf16.msra.mxu0 0
    %759 = vmatprep.subr.bf16.mxu0 0
    %760 = vmatpush1.bf16.msra.mxu0 0
    %761 = vmatprep.subr.bf16.mxu0 0
    %762 = vmatpush1.bf16.msra.mxu0 0
    %763 = vmatprep.subr.bf16.mxu0 0
    %764 = vmatpush1.bf16.msra.mxu0 %v747
    %765 = vmatprep.subr.bf16.mxu0 0
    %766 = vmatpush2.bf16.msra.mxu0 0
    %767 = vmatprep.subr.bf16.mxu0 0
    %768 = vmatpush2.bf16.msra.mxu0 0
    %769 = vmatprep.subr.bf16.mxu0 0
    %770 = vmatpush2.bf16.msra.mxu0 0
    %771 = vmatprep.subr.bf16.mxu0 0
    %772 = vmatpush2.bf16.msra.mxu0 0
    %773 = vmatprep.subr.bf16.mxu0 0
    %774 = vmatpush2.bf16.msra.mxu0 0
    %775 = vmatprep.subr.bf16.mxu0 0
    %776 = vmatpush2.bf16.msra.mxu0 0
    %777 = vmatprep.subr.bf16.mxu0 0
    %778 = vmatpush2.bf16.msra.mxu0 0
    %779 = vmatprep.subr.bf16.mxu0 0
    %780 = vmatpush2.bf16.msra.mxu0 0
    %781 = vmatprep.mubr.bf16.mxu0 0
    %782 = vmatmul.mubr.bf16.gmra.mxu0 %v741
    %v783 = vpop.f32.mrf.mxu0
    %v784 = vadd.f32 %v737, %v783
    %v785 = vpop.f32.mrf.mxu0
    %v786 = vpop.f32.mrf.mxu0
    %v787 = vpop.f32.mrf.mxu0
    %788 = vdwg.mxu0
    %v789 = vmul.f32 %v726, %v784
    %v790 = vsub.f32 0.0, %v789
    %v791 = vmul.f32 %v790, 1.442695
    %v792 = vpow.pop %v791
    %v793 = vadd.f32 %v792, 1.0
    %v794 = vrcp.pop %v793
    %v795 = vmul.f32 %v789, %v794
    %v796 = vpack.c.bf16 %v795, %v795
    %v797 = vld [vmem:[%s11] sm:$0x1]
    %v799 = vlaneseq
    %v800 = vshrl.u32 %v799, 7
    %v801 = vsub.s32 0, %v800
    %v802 = vrot.slane %v797, %v801
    %v812 = vunpack.c.l.b16 %v104
    %v813 = vunpack.c.l.b16 %v105
    %v814 = vunpack.c.l.b16 %v106
    %v815 = vunpack.c.l.b16 %v107
    %v816 = vunpack.c.l.b16 %v108
    %v817 = vunpack.c.l.b16 %v109
    %v818 = vunpack.c.l.b16 %v110
    %v819 = vunpack.c.l.b16 %v111
    %v820 = vpack.c.b16 %v813, %v812
    %v821 = vpack.c.b16 %v815, %v814
    %v822 = vpack.c.b16 %v817, %v816
    %v823 = vpack.c.b16 %v819, %v818
    %v829 = vsel %vm341, %v796, 0
    %831 = vmatprep.subr.bf16.mxu0 0
    %832 = vmatpush1.bf16.msra.mxu0 0
    %833 = vmatprep.subr.bf16.mxu0 0
    %834 = vmatpush1.bf16.msra.mxu0 0
    %835 = vmatprep.subr.bf16.mxu0 0
    %836 = vmatpush1.bf16.msra.mxu0 0
    %837 = vmatprep.subr.bf16.mxu0 0
    %838 = vmatpush1.bf16.msra.mxu0 0
    %839 = vmatprep.subr.bf16.mxu0 0
    %840 = vmatpush1.bf16.msra.mxu0 %v823
    %841 = vmatprep.subr.bf16.mxu0 0
    %842 = vmatpush1.bf16.msra.mxu0 %v822
    %843 = vmatprep.subr.bf16.mxu0 0
    %844 = vmatpush1.bf16.msra.mxu0 %v821
    %845 = vmatprep.subr.bf16.mxu0 0
    %846 = vmatpush1.bf16.msra.mxu0 %v820
    %847 = vmatprep.subr.bf16.mxu0 0
    %848 = vmatpush2.bf16.msra.mxu0 0
    %849 = vmatprep.subr.bf16.mxu0 0
    %850 = vmatpush2.bf16.msra.mxu0 0
    %851 = vmatprep.subr.bf16.mxu0 0
    %852 = vmatpush2.bf16.msra.mxu0 0
    %853 = vmatprep.subr.bf16.mxu0 0
    %854 = vmatpush2.bf16.msra.mxu0 0
    %855 = vmatprep.subr.bf16.mxu0 0
    %856 = vmatpush2.bf16.msra.mxu0 0
    %857 = vmatprep.subr.bf16.mxu0 0
    %858 = vmatpush2.bf16.msra.mxu0 0
    %859 = vmatprep.subr.bf16.mxu0 0
    %860 = vmatpush2.bf16.msra.mxu0 0
    %861 = vmatprep.subr.bf16.mxu0 0
    %862 = vmatpush2.bf16.msra.mxu0 0
    %863 = vmatprep.mubr.bf16.mxu0 0
    %864 = vmatmul.mubr.bf16.gmra.mxu0 %v829
    %v865 = vpop.f32.mrf.mxu0
    %v866 = vadd.f32 %v802, %v865
    %v867 = vpop.f32.mrf.mxu0
    %v868 = vpop.f32.mrf.mxu0
    %v869 = vpop.f32.mrf.mxu0
    %870 = vdwg.mxu0
    %871 = vst [vmem:[#allocation2] sm:$0x3] %v866
    // Predicated region
    $region50: #{tpu_custom_call.1} parent=1 // pred_check
      _
    $region51: #{tpu_custom_call.1} parent=1 // pred_check_branch
      %873 = sbr.rel (0) target = $region53
    $region52: #{tpu_custom_call.1} parent=1 // pred_region
      %s875 = ssub.s32 32, 32
      %876 = vsyncadd [#allocation3], %s875
      %s878 = sshll.u32 [#allocation2], 4
      %s879 = int_to_ptr.vmem [resolvable:$true] %s878
      %881 = dma.vmem_to_hbm [thread:$0]  %s879, 32, %s12, [#allocation3]
    $region53: #{tpu_custom_call.1} parent=1 // pred_fallthru
      _
    // Predicated region
    $region54: #{tpu_custom_call.1} parent=1 // pred_check
      _
    $region55: #{tpu_custom_call.1} parent=1 // pred_check_branch
      %883 = sbr.rel (0) target = $region57
    $region56: #{tpu_custom_call.1} parent=1 // pred_region
      %884 = dma.done [#allocation3], 32
    $region57: #{tpu_custom_call.1} parent=1 // pred_fallthru
      _
    %885 = vsyncpa [#allocation3], 1

</llo_original>
